<compile_context>
chip_gen: v6e
topology: v6e:2x2x1
jax: 0.10.0
libtpu: 0.0.40
codegen_flags: <defaults>
</compile_context>

<pallas_src>
import functools

import jax
import jax.numpy as jnp
from jax.experimental import pallas as pl
from jax.experimental.pallas import tpu as pltpu


# ----------------------------------------------------------------------------
# Kernel 1: fused per-layer recurrence (grid = (B, T), hidden state in VMEM).
# ----------------------------------------------------------------------------
def _layer_kernel(x_ref, s_ref, e_ref,
                  wpxg_ref, wphg_ref, bg_ref,
                  wpxu_ref, wphu_ref, bu_ref,
                  xwg_ref, xwu_ref, wwsg_ref, wwsu_ref,
                  tg_ref, tu_ref,
                  o_ref, h_scr,
                  *, link_len, embed_dim, hidden):
    f32 = jnp.float32
    t = pl.program_id(1)

    @pl.when(t == 0)
    def _():                                   # new batch element -> h = 0
        h_scr[...] = jnp.zeros_like(h_scr)

    x = x_ref[0, 0].astype(f32)                # (N, Cx)
    h = h_scr[...]                             # (N, H)
    e = e_ref[...].astype(f32)                 # (N, D)

    def e_contract(pre, co):
        # out[n, o] = sum_d E[n, d] * pre[n, d*co + o]
        acc = e[:, 0:1] * pre[:, 0:co]
        for d in range(1, embed_dim):
            acc = acc + e[:, d:d + 1] * pre[:, d * co:(d + 1) * co]
        return acc

    def branch(hlike, wpx_ref, wph_ref, b_ref, xw_x, wws, topo, co):
        # Graph propagation: sum_k S[k] @ (x @ WPx[k] + hlike @ WPh[k]),
        # hop 0 support is the identity so it is folded in directly.
        gpre = (jnp.dot(x, wpx_ref[0], preferred_element_type=f32) +
                jnp.dot(hlike, wph_ref[0], preferred_element_type=f32))
        for k in range(1, link_len):
            hop = (jnp.dot(x, wpx_ref[k], preferred_element_type=f32) +
                   jnp.dot(hlike, wph_ref[k], preferred_element_type=f32))
            gpre = gpre + jnp.dot(s_ref[k], hop, preferred_element_type=f32)
        # Temporal-window contribution (hop-0 weights, window-transformed x
        # and state part folded analytically, as in the reconstruction).
        wpre = (jnp.dot(xw_x, wpx_ref[0], preferred_element_type=f32) +
                jnp.dot(hlike * wws, wph_ref[0], preferred_element_type=f32))
        g_graph = e_contract(gpre, co) + b_ref[...]
        g_win = e_contract(wpre, co)
        return topo * g_graph + g_win          # topo: (1, co)

    xw_g = xwg_ref[0].astype(f32)              # (N, Cx)
    xw_u = xwu_ref[0].astype(f32)
    topo_g = tg_ref[0].astype(f32)             # (1, 2H)
    topo_u = tu_ref[0].astype(f32)             # (1, H)

    zr = jax.nn.sigmoid(branch(h, wpxg_ref, wphg_ref, bg_ref,
                               xw_g, wwsg_ref[...], topo_g, 2 * hidden))
    z = zr[:, :hidden]
    r = zr[:, hidden:]
    zh = z * h
    hc = jnp.tanh(branch(zh, wpxu_ref, wphu_ref, bu_ref,
                         xw_u, wwsu_ref[...], topo_u, hidden))
    h_new = r * h + (1.0 - r) * hc
    h_scr[...] = h_new
    o_ref[0, pl.ds(t, 1), :, :] = h_new[None].astype(o_ref.dtype)


@jax.jit
def run_layer(current, S, E, gate_p, upd_p, topo_g, topo_u):
    """One NLSGCRNCNN layer over the full time window (single pallas_call)."""
    B, T, N, Cx = current.shape
    K = S.shape[0]
    D = E.shape[1]
    H = topo_u.shape[-1]

    def prep(mp):
        # weights_pool: (D, K, Ci, Co) -> hop/x/h slabs in the (d*Co + o) space
        WP = mp["weights_pool"]
        Co = WP.shape[-1]
        WPt = jnp.transpose(WP, (1, 2, 0, 3))              # (K, Ci, D, Co)
        WPx = WPt[:, :Cx].reshape(K, Cx, D * Co)
        WPh = WPt[:, Cx:].reshape(K, WP.shape[2] - Cx, D * Co)
        bvec = E @ mp["bias_pool"]                         # (N, Co)
        WwT = (jnp.einsum("nd,dti->nti", E, mp["weights_window"])
               * mp["T"][None, :, None])                   # (N, T, Ci)
        xw = jnp.einsum("btni,nti->bni", current, WwT[:, :, :Cx])   # (B,N,Cx)
        wws = WwT[:, :, Cx:].sum(axis=1)                   # (N, H)
        return WPx, WPh, bvec, xw, wws, Co

    WPxg, WPhg, bg, xwg, wwsg, Cg = prep(gate_p)
    WPxu, WPhu, bu, xwu, wwsu, Cu = prep(upd_p)

    kern = functools.partial(_layer_kernel, link_len=K, embed_dim=D, hidden=H)

    def full(*dims):
        return pl.BlockSpec(tuple(dims), lambda b, t, _n=len(dims): (0,) * _n)

    def perb(*dims):
        return pl.BlockSpec((1,) + tuple(dims),
                            lambda b, t, _n=len(dims): (b,) + (0,) * _n)

    return pl.pallas_call(
        kern,
        out_shape=jax.ShapeDtypeStruct((B, T, N, H), jnp.float32),
        grid=(B, T),
        in_specs=[
            pl.BlockSpec((1, 1, N, Cx), lambda b, t: (b, t, 0, 0)),  # x_t
            full(K, N, N),                                           # supports
            full(N, D),                                              # embeddings
            full(K, Cx, D * Cg), full(K, H, D * Cg), full(N, Cg),    # gate
            full(K, Cx, D * Cu), full(K, H, D * Cu), full(N, Cu),    # update
            perb(N, Cx), perb(N, Cx),                                # xw_g/xw_u
            full(N, H), full(N, H),                                  # wws_g/wws_u
            perb(1, Cg), perb(1, Cu),                                # topo g/u
        ],
        out_specs=pl.BlockSpec((1, T, N, H), lambda b, t: (b, 0, 0, 0)),
        scratch_shapes=[pltpu.VMEM((N, H), jnp.float32)],
        compiler_params=pltpu.CompilerParams(
            dimension_semantics=("parallel", "arbitrary")),
    )(current, S, E, WPxg, WPhg, bg, WPxu, WPhu, bu,
      xwg, xwu, wwsg, wwsu, topo_g, topo_u)


# ----------------------------------------------------------------------------
# Kernel 2: zigzag-PI CNN, conv1 as a lane-dense (8,25)@(25,M) matmul, tiled
#           along the lane (spatial*batch) dim with a 'parallel' grid.
# ----------------------------------------------------------------------------
def _conv1_kernel(p_ref, w_ref, b_ref, o_ref):
    y = jnp.dot(w_ref[...], p_ref[...], preferred_element_type=jnp.float32)
    o_ref[...] = jnp.maximum(y + b_ref[...], 0.0)


@functools.partial(jax.jit, static_argnames=("chunk",))
def conv1_relu(p1T, w1, b1, *, chunk):
    Kf, M = p1T.shape
    C = w1.shape[0]
    return pl.pallas_call(
        _conv1_kernel,
        out_shape=jax.ShapeDtypeStruct((C, M), jnp.float32),
        grid=(M // chunk,),
        in_specs=[pl.BlockSpec((Kf, chunk), lambda i: (0, i)),
                  pl.BlockSpec((C, Kf), lambda i: (0, 0)),
                  pl.BlockSpec((C, 1), lambda i: (0, 0))],
        out_specs=pl.BlockSpec((C, chunk), lambda i: (0, i)),
        compiler_params=pltpu.CompilerParams(dimension_semantics=("parallel",)),
    )(p1T, w1, b1.reshape(C, 1))


# ----------------------------------------------------------------------------
# Kernel 3: conv2 + FC + sigmoid fused (per-batch grid), conv2 activations
#           stay in VMEM / vregs and never touch HBM.
# ----------------------------------------------------------------------------
def _conv2_fc_kernel(p_ref, w2_ref, b2_ref, wfc_ref, bfc_ref, o_ref):
    b = pl.program_id(0)
    y = jnp.dot(w2_ref[...], p_ref[0], preferred_element_type=jnp.float32)
    y = jnp.maximum(y + b2_ref[...], 0.0)                       # (1, 484)
    z = jnp.dot(y, wfc_ref[...], preferred_element_type=jnp.float32) + bfc_ref[...]
    o_ref[pl.ds(b, 1), :] = jax.nn.sigmoid(z)


@jax.jit
def conv2_fc_sigmoid(p2T, w2, b2, fc_w, fc_b):
    B, Kf, P2 = p2T.shape
    Co = fc_w.shape[0]
    return pl.pallas_call(
        _conv2_fc_kernel,
        out_shape=jax.ShapeDtypeStruct((B, Co), jnp.float32),
        grid=(B,),
        in_specs=[pl.BlockSpec((1, Kf, P2), lambda b: (b, 0, 0)),
                  pl.BlockSpec((1, Kf), lambda b: (0, 0)),
                  pl.BlockSpec((1, 1), lambda b: (0, 0)),
                  pl.BlockSpec((P2, Co), lambda b: (0, 0)),
                  pl.BlockSpec((1, Co), lambda b: (0, 0))],
        out_specs=pl.BlockSpec((B, Co), lambda b: (0, 0)),
        compiler_params=pltpu.CompilerParams(dimension_semantics=("arbitrary",)),
    )(p2T, w2, b2.reshape(1, 1), fc_w.T, fc_b.reshape(1, Co))


# ----------------------------------------------------------------------------
# Kernel 4: prediction head = end_conv (1xH) + FC(N->2) + log_softmax, as one
#           vectorized matmul on a pre-combined (N*H, 2*O) weight.
# ----------------------------------------------------------------------------
def _head_kernel(x_ref, g_ref, c_ref, o_ref, *, out_dim):
    logits = (jnp.dot(x_ref[...], g_ref[...], preferred_element_type=jnp.float32)
              + c_ref[...])                                    # (B, 2*O)
    for o in range(out_dim):                                    # O is typically 1
        lg = logits[:, 2 * o:2 * o + 2]
        m = jnp.max(lg, axis=-1, keepdims=True)
        lse = jnp.log(jnp.sum(jnp.exp(lg - m), axis=-1, keepdims=True)) + m
        o_ref[:, 2 * o:2 * o + 2] = lg - lse


@jax.jit
def head(xh, G, const):
    B, NH = xh.shape
    two_o = G.shape[1]
    kern = functools.partial(_head_kernel, out_dim=two_o // 2)
    return pl.pallas_call(
        kern,
        out_shape=jax.ShapeDtypeStruct((B, two_o), jnp.float32),
        grid=(1,),
        in_specs=[pl.BlockSpec((B, NH), lambda i: (0, 0)),
                  pl.BlockSpec((NH, two_o), lambda i: (0, 0)),
                  pl.BlockSpec((1, two_o), lambda i: (0, 0))],
        out_specs=pl.BlockSpec((B, two_o), lambda i: (0, 0)),
    )(xh, G, const)


# ----------------------------------------------------------------------------
# Plain-JAX glue: im2col, supports, parameter init, forward.
# ----------------------------------------------------------------------------
def _im2col(x, k, stride):
    # x: (B, C, H, W) NCHW -> (B*Ho*Wo, C*k*k) patches, torch weight ordering.
    B, C, H, W = x.shape
    Ho = (H - k) // stride + 1
    Wo = (W - k) // stride + 1
    cols = []
    for di in range(k):
        for dj in range(k):
            cols.append(x[:, :, di:di + stride * (Ho - 1) + 1:stride,
                          dj:dj + stride * (Wo - 1) + 1:stride])
    p = jnp.stack(cols, axis=2)                        # (B, C, k*k, Ho, Wo)
    p = p.transpose(0, 3, 4, 1, 2).reshape(B * Ho * Wo, C * k * k)
    return p, Ho, Wo


def compute_supports(E, link_len):
    N = E.shape[0]
    A = jax.nn.softmax(jnp.maximum(E @ E.T, 0.0), axis=1)
    sup = [jnp.eye(N, dtype=jnp.float32), A]
    for _ in range(2, link_len):
        sup.append(A @ sup[-1])
    return jnp.stack(sup, axis=0)                      # (K, N, N)


@jax.jit
def topo_cnn(PI, mp):
    # zigzag persistence image -> conv(5,2) -> relu -> conv(5,2) -> relu -> FC
    # -> sigmoid (topological weight).
    B = PI.shape[0]
    p1, H1, W1 = _im2col(PI, 5, 2)                                  # 100 -> 48
    y1 = conv1_relu(p1.T, mp["conv1_w"].reshape(8, 25), mp["conv1_b"],
                    chunk=H1 * W1)                                   # (8, B*2304)
    y1 = y1.reshape(8, B, H1, W1).transpose(1, 0, 2, 3)              # (B,8,48,48)
    p2, H2, W2 = _im2col(y1, 5, 2)                                   # 48 -> 22
    p2T = p2.reshape(B, H2 * W2, 8 * 25).transpose(0, 2, 1)          # (B,200,484)
    return conv2_fc_sigmoid(p2T, mp["conv2_w"].reshape(1, 200), mp["conv2_b"],
                            mp["fc_w"], mp["fc_b"])                  # (B, Co)


def init_params(key, cfg):
    keys = iter(jax.random.split(key, 64))

    def nrm(shape, scale=0.1):
        return (scale * jax.random.normal(next(keys), shape)).astype(jnp.float32)

    N, Din, H = cfg["num_nodes"], cfg["input_dim"], cfg["rnn_units"]
    O, L, d = cfg["output_dim"], cfg["num_layers"], cfg["embed_dim"]
    T, K = cfg["window_len"], cfg["link_len"]
    params = {"node_embeddings": nrm((N, d), 1.0), "layers": []}
    for l in range(L):
        ci = (Din if l == 0 else H) + H

        def zgcn(co, ci=ci):
            return dict(
                weights_pool=nrm((d, K, ci, co)),
                weights_window=nrm((d, T, ci)),
                bias_pool=nrm((d, co)),
                T=nrm((T,), 1.0),
                conv1_w=nrm((8, 1, 5, 5)), conv1_b=nrm((8,)),
                conv2_w=nrm((1, 8, 5, 5)), conv2_b=nrm((1,)),
                fc_w=nrm((co, 22 * 22)), fc_b=nrm((co,)),
            )

        params["layers"].append(dict(gate=zgcn(2 * H), update=zgcn(H)))
    params["end_conv_w"] = nrm((O, 1, 1, H))
    params["end_conv_b"] = nrm((O,))
    params["fc_w"] = nrm((2, N))
    params["fc_b"] = nrm((2,))
    return params


def forward(params, data, cfg):
    x = data["x"].astype(jnp.float32)              # (B, T, N, Din)
    B, T, N, Din = x.shape
    assert N == cfg["num_nodes"] and Din == cfg["input_dim"]
    assert T == cfg["window_len"]
    H, K, O = cfg["rnn_units"], cfg["link_len"], cfg["output_dim"]

    PI = data["wdp"][:, 0].reshape(B, 1, 100, 100).astype(jnp.float32)
    E = params["node_embeddings"]
    S = compute_supports(E, K)

    current = x
    for lp in params["layers"]:
        topo_g = topo_cnn(PI, lp["gate"]).reshape(B, 1, 2 * H)
        topo_u = topo_cnn(PI, lp["update"]).reshape(B, 1, H)
        current = run_layer(current, S, E, lp["gate"], lp["update"],
                            topo_g, topo_u)        # (B, T, N, H)

    # head: combine end_conv (1,H) kernel and FC(N->2) into one (N*H, 2*O) map
    h_last = current[:, -1].reshape(B, N * H)
    wc = params["end_conv_w"].reshape(O, H).T      # (H, O)
    wfc = params["fc_w"]                           # (2, N)
    G = jnp.einsum("ho,cn->nhoc", wc, wfc).reshape(N * H, O * 2)
    const = (params["end_conv_b"][:, None] * wfc.sum(axis=1)[None, :]
             + params["fc_b"][None, :]).reshape(1, O * 2)
    logp = head(h_last, G, const).reshape(B * O, 2)   # (B*O, 2) log-probs
    return logp, None


if __name__ == "__main__":
    cfg = dict(num_nodes=16, input_dim=2, rnn_units=32, output_dim=1,
               num_layers=2, embed_dim=8, window_len=8, link_len=2, batch=2)
    key = jax.random.PRNGKey(0)
    pkey, xkey, wkey = jax.random.split(key, 3)
    params = init_params(pkey, cfg)

    B, T, N, Din = cfg["batch"], cfg["window_len"], cfg["num_nodes"], cfg["input_dim"]
    data = {
        "x": jax.random.normal(xkey, (B, T, N, Din), dtype=jnp.float32),
        "wdp": jax.random.uniform(wkey, (B, 1, 100, 100), dtype=jnp.float32),
    }

    logp, _ = forward(params, data, cfg)
    logp = jax.block_until_ready(logp)
    assert logp.shape == (B * cfg["output_dim"], 2)
    assert bool(jnp.all(jnp.isfinite(logp)))
    # log_softmax rows must (approximately) exponentiate-sum to 1
    assert bool(jnp.allclose(jnp.sum(jnp.exp(logp), axis=-1), 1.0, atol=1e-4))
    print("KERNEL_OK")
</pallas_src>

<mosaic_0001>
module attributes {stable_mosaic.version = 11 : i64} {
  func.func @_conv1_kernel(%arg0: i32, %arg1: memref<25x2304xf32, #tpu.memory_space<vmem>>, %arg2: memref<8x25xf32, #tpu.memory_space<vmem>>, %arg3: memref<8x1xf32, #tpu.memory_space<vmem>>, %arg4: memref<8x2304xf32, #tpu.memory_space<vmem>>) attributes {dimension_semantics = [#tpu.dimension_semantics<parallel>], iteration_bounds = array<i64: 2>, scalar_prefetch = 0 : i64, scratch_operands = 0 : i64, tpu.core_type = #tpu.core_type<tc>, window_params = [{transform_indices = @transform_0, window_bounds = array<i64: 25, 2304>}, {pipeline_mode = #tpu.pipeline_mode<synchronous>, transform_indices = @transform_1, window_bounds = array<i64: 8, 25>}, {pipeline_mode = #tpu.pipeline_mode<synchronous>, transform_indices = @transform_2, window_bounds = array<i64: 8, 1>}, {transform_indices = @transform_3, window_bounds = array<i64: 8, 2304>}]} {
    %c0 = arith.constant 0 : index
    %c0_0 = arith.constant 0 : index
    %0 = vector.load %arg2[%c0, %c0_0] : memref<8x25xf32, #tpu.memory_space<vmem>>, vector<8x25xf32>
    %c0_1 = arith.constant 0 : index
    %c0_2 = arith.constant 0 : index
    %1 = vector.load %arg1[%c0_1, %c0_2] : memref<25x2304xf32, #tpu.memory_space<vmem>>, vector<25x2304xf32>
    %cst = arith.constant dense<0.000000e+00> : vector<8x2304xf32>
    %2 = tpu.matmul %0, %1, %cst {dimension_numbers = #tpu.dot_dimension_numbers<[1], [0], [0], [1], [0, 0, 1, 1], [], []>} : vector<8x25xf32>, vector<25x2304xf32>, vector<8x2304xf32> -> vector<8x2304xf32>
    %c0_3 = arith.constant 0 : index
    %c0_4 = arith.constant 0 : index
    %3 = vector.load %arg3[%c0_3, %c0_4] : memref<8x1xf32, #tpu.memory_space<vmem>>, vector<8x1xf32>
    %4 = vector.broadcast %3 : vector<8x1xf32> to vector<8x2304xf32>
    %5 = arith.addf %2, %4 : vector<8x2304xf32>
    %cst_5 = arith.constant 0.000000e+00 : f32
    %6 = vector.broadcast %cst_5 : f32 to vector<8x2304xf32>
    %7 = arith.maximumf %5, %6 : vector<8x2304xf32>
    %c0_6 = arith.constant 0 : index
    %c0_7 = arith.constant 0 : index
    %8 = vector.load %arg4[%c0_6, %c0_7] : memref<8x2304xf32, #tpu.memory_space<vmem>>, vector<8x2304xf32>
    tpu.vector_store %arg4[%c0_6, %c0_7], %7 {strides = array<i32>} : memref<8x2304xf32, #tpu.memory_space<vmem>>, vector<8x2304xf32>,
    return
  }
  func.func @transform_0(%arg0: i32) -> (i32, i32) {
    %c0_i32 = arith.constant 0 : i32
    %c0_i32_0 = arith.constant 0 : i32
    return %c0_i32, %arg0 : i32, i32
  }
  func.func @transform_1(%arg0: i32) -> (i32, i32) {
    %c0_i32 = arith.constant 0 : i32
    %c0_i32_0 = arith.constant 0 : i32
    %c0_i32_1 = arith.constant 0 : i32
    return %c0_i32, %c0_i32_0 : i32, i32
  }
  func.func @transform_2(%arg0: i32) -> (i32, i32) {
    %c0_i32 = arith.constant 0 : i32
    %c0_i32_0 = arith.constant 0 : i32
    %c0_i32_1 = arith.constant 0 : i32
    return %c0_i32, %c0_i32_0 : i32, i32
  }
  func.func @transform_3(%arg0: i32) -> (i32, i32) {
    %c0_i32 = arith.constant 0 : i32
    %c0_i32_0 = arith.constant 0 : i32
    return %c0_i32, %arg0 : i32, i32
  }
}

</mosaic_0001>

<llo_original>
// kernel: conv1_relu.1
$region0: #{conv1_relu.1}
  #allocation0 [shape = 'u32[]', space=smem, size = 0x4, offset = 0x4, fixed_abs, tag = 'smem constant byte address 0x4 - core index']
  #allocation1 [shape = 'u32[144,128]{1,0:T(1,128)}', space=vmem, size = 0x12000, scoped, tag = 'internal scratch']
  %s0 = inlined_call_operand.hbm [shape: f32[25,4608], index: 0, kind: input, shape index: {}]
  %s1 = inlined_call_operand.vmem [shape: f32[8,25], index: 1, kind: input, shape index: {}]
  %s2 = inlined_call_operand.vmem [shape: f32[8,1], index: 2, kind: input, shape index: {}]
  %s3 = inlined_call_operand.hbm [shape: f32[8,4608], index: 3, kind: output, shape index: {}]
  %s4 = sld [smem:[#allocation0]]
  $region49: #{conv1_relu.1} parent=0
    _
  %s6 = ssub.s32 1, %s4
  %s7 = scalar_select 0, %s6, %s4
  $region1: #{conv1_relu.1} parent=0
    #allocation2 [shape = 'u8[589824]{0}', space=vmem, size = 0x90000, scoped, tag = 'input window, operand 0']
    #allocation3 [shape = 's32[2]{0}', space=sflag, size = 0x8, scoped, tag = 'scoped memory for conv1_relu.1']
    #allocation4 [shape = 's32[2]{0}', space=sflag, size = 0x8, scoped, tag = 'scoped memory for conv1_relu.1']
    #allocation5 [shape = 'u8[147456]{0}', space=vmem, size = 0x24000, scoped, tag = 'output window, operand 0']
    %8 = vsyncpa [#allocation3], 0
    %s9 = scalar_lea.sflag [#allocation3], 1
    %10 = vsyncpa %s9, 0
    %11 = vsyncpa [#allocation4], 0
    %s12 = scalar_lea.sflag [#allocation4], 1
    %13 = vsyncpa %s12, 0
    loop: start=0, step=1, limit=4
    $region2: #{conv1_relu.1} parent=1 // loop_pre_header
      _
    $region3: #{conv1_relu.1} parent=1 // loop_header
      %s15 = sphi 0, %s19
      %p16 = scmp.ge.s32.totalorder %s15, 4
      %s25 = sphi 0, %s27
      %s28 = sphi 0, %s25
      %s29 = sphi 0, %s28
      %s45 = sphi 0, %s29
      %s49 = sphi 0, %s49
      %s51 = sphi 0, %s49
      %s52 = sphi 0, %s51
      %s66 = sphi 0, %s52
      %s70 = sphi 0, %s70
      %s72 = sphi 0, %s70
      %s73 = sphi 0, %s72
      %s87 = sphi 0, %s73
      %s93 = sphi 0, %s95
      %s96 = sphi 0, %s93
      %s97 = sphi 0, %s96
      %s113 = sphi 0, %s97
    $region4: #{conv1_relu.1} parent=1 // loop_header_branch
      %18 = sbr.rel (%p16) target = $region8
    $region5: #{conv1_relu.1} parent=1 // loop_body
      %s20 = ssub.s32 %s15, 1
      %s21 = ssub.s32 %s15, 2
      %s22 = sadd.s32 %s15, 1
      %s23 = ssub.s32 %s15, %s22
      %p24 = scmp.eq.s32.totalorder %s23, 0
      %s26 = sadd.s32 %s25, 1
      %s27 = scalar_select %p24, %s25, %s26
      %p30 = pneg %p24
      %p31 = scmp.eq.s32.totalorder %s15, 1
      %p32 = por %p30, %p31
      %p33 = scmp.ne.s32.totalorder %s25, %s28
      %p34 = scmp.eq.s32.totalorder %s15, 0
      %p35 = por %p33, %p34
      %p36 = scmp.ne.s32.totalorder %s25, %s28
      %p37 = scmp.eq.s32.totalorder %s20, 1
      %p38 = por %p36, %p37
      %p39 = scmp.ne.s32.totalorder %s28, %s29
      %p40 = scmp.eq.s32.totalorder %s20, 0
      %p41 = por %p39, %p40
      %p42 = scmp.ne.s32.totalorder %s28, %s29
      %p43 = scmp.eq.s32.totalorder %s21, 1
      %p44 = por %p42, %p43
      %p46 = scmp.ne.s32.totalorder %s29, %s45
      %p47 = scmp.eq.s32.totalorder %s21, 0
      %p48 = por %p46, %p47
      %s50 = sadd.s32 %s49, 1
      %p53 = scmp.eq.s32.totalorder %s15, 1
      %p54 = scmp.ne.s32.totalorder %s49, %s51
      %p55 = scmp.eq.s32.totalorder %s15, 0
      %p56 = por %p54, %p55
      %p57 = scmp.ne.s32.totalorder %s49, %s51
      %p58 = scmp.eq.s32.totalorder %s20, 1
      %p59 = por %p57, %p58
      %p60 = scmp.ne.s32.totalorder %s51, %s52
      %p61 = scmp.eq.s32.totalorder %s20, 0
      %p62 = por %p60, %p61
      %p63 = scmp.ne.s32.totalorder %s51, %s52
      %p64 = scmp.eq.s32.totalorder %s21, 1
      %p65 = por %p63, %p64
      %p67 = scmp.ne.s32.totalorder %s52, %s66
      %p68 = scmp.eq.s32.totalorder %s21, 0
      %p69 = por %p67, %p68
      %s71 = sadd.s32 %s70, 1
      %p74 = scmp.eq.s32.totalorder %s15, 1
      %p75 = scmp.ne.s32.totalorder %s70, %s72
      %p76 = scmp.eq.s32.totalorder %s15, 0
      %p77 = por %p75, %p76
      %p78 = scmp.ne.s32.totalorder %s70, %s72
      %p79 = scmp.eq.s32.totalorder %s20, 1
      %p80 = por %p78, %p79
      %p81 = scmp.ne.s32.totalorder %s72, %s73
      %p82 = scmp.eq.s32.totalorder %s20, 0
      %p83 = por %p81, %p82
      %p84 = scmp.ne.s32.totalorder %s72, %s73
      %p85 = scmp.eq.s32.totalorder %s21, 1
      %p86 = por %p84, %p85
      %p88 = scmp.ne.s32.totalorder %s73, %s87
      %p89 = scmp.eq.s32.totalorder %s21, 0
      %p90 = por %p88, %p89
      %s91 = ssub.s32 %s15, %s22
      %p92 = scmp.eq.s32.totalorder %s91, 0
      %s94 = sadd.s32 %s93, 1
      %s95 = scalar_select %p92, %s93, %s94
      %p98 = pneg %p92
      %p99 = scmp.eq.s32.totalorder %s15, 1
      %p100 = por %p98, %p99
      %p101 = scmp.ne.s32.totalorder %s93, %s96
      %p102 = scmp.eq.s32.totalorder %s15, 0
      %p103 = por %p101, %p102
      %p104 = scmp.ne.s32.totalorder %s93, %s96
      %p105 = scmp.eq.s32.totalorder %s20, 1
      %p106 = por %p104, %p105
      %p107 = scmp.ne.s32.totalorder %s96, %s97
      %p108 = scmp.eq.s32.totalorder %s20, 0
      %p109 = por %p107, %p108
      %p110 = scmp.ne.s32.totalorder %s96, %s97
      %p111 = scmp.eq.s32.totalorder %s21, 1
      %p112 = por %p110, %p111
      %p114 = scmp.ne.s32.totalorder %s97, %s113
      %p115 = scmp.eq.s32.totalorder %s21, 0
      %p116 = por %p114, %p115
      %p117 = scmp.le.s32.totalorder 1, %s15
      %p118 = scmp.lt.s32.totalorder %s15, 3
      %p119 = pnand %p117, %p118
      %p120 = pneg %p119
      // Predicated region
      $region9: #{conv1_relu.1} parent=5 // pred_check
        _
      $region10: #{conv1_relu.1} parent=5 // pred_check_branch
        %122 = sbr.rel (%p119) target = $region12
      $region11: #{conv1_relu.1} parent=5 // pred_region
        %s123 = ssub.s32 %s15, 1
        // Predicated region
        $region13: #{conv1_relu.1} parent=11 // pred_check
          %p124 = pneg %p62
        $region14: #{conv1_relu.1} parent=11 // pred_check_branch
          %126 = sbr.rel (%p124) target = $region16
        $region15: #{conv1_relu.1} parent=11 // pred_region
          _
        $region16: #{conv1_relu.1} parent=11 // pred_fallthru
          _
        // Predicated region
        $region17: #{conv1_relu.1} parent=11 // pred_check
          %p127 = pneg %p83
        $region18: #{conv1_relu.1} parent=11 // pred_check_branch
          %129 = sbr.rel (%p127) target = $region20
        $region19: #{conv1_relu.1} parent=11 // pred_region
          _
        $region20: #{conv1_relu.1} parent=11 // pred_fallthru
          _
      $region12: #{conv1_relu.1} parent=5 // pred_fallthru
        _
      %p130 = scmp.lt.s32.totalorder %s15, 2
      // Predicated region
      $region21: #{conv1_relu.1} parent=5 // pred_check
        %p131 = pneg %p130
      $region22: #{conv1_relu.1} parent=5 // pred_check_branch
        %133 = sbr.rel (%p131) target = $region24
      $region23: #{conv1_relu.1} parent=5 // pred_region
        // Predicated region
        $region25: #{conv1_relu.1} parent=23 // pred_check
          %p134 = pneg %p35
        $region26: #{conv1_relu.1} parent=23 // pred_check_branch
          %136 = sbr.rel (%p134) target = $region28
        $region27: #{conv1_relu.1} parent=23 // pred_region
          %s137 = sand.u32 %s25, 1
          %s138 = scalar_lea.sflag [#allocation3], %s137
          %s139 = sand.u32 %s25, 1
          %s140 = smul.addr %s139, 576
          %s141 = scalar_lea.vmem [#allocation2], %s140
          %s142 = smul.u32 18, %s15
          %s144 = ssub.s32 9216, 9216
          %145 = vsyncadd %s138, %s144
          %s146 = smul.addr %s142, 128
          %s147 = scalar_lea.hbm %s0, %s146
          %s148 = sshll.u32 %s141, 4
          %s149 = int_to_ptr.vmem [resolvable:$true] %s148
          %154 = dma.hbm_to_vmem [thread:$0]  %s147, 9216, %s149, %s138, 4608, 2304, 144
        $region28: #{conv1_relu.1} parent=23 // pred_fallthru
          _
      $region24: #{conv1_relu.1} parent=5 // pred_fallthru
        _
      %p155 = scmp.le.s32.totalorder 1, %s15
      %p156 = scmp.lt.s32.totalorder %s15, 3
      %p157 = pnand %p155, %p156
      %p158 = pneg %p157
      // Predicated region
      $region29: #{conv1_relu.1} parent=5 // pred_check
        _
      $region30: #{conv1_relu.1} parent=5 // pred_check_branch
        %160 = sbr.rel (%p157) target = $region32
      $region31: #{conv1_relu.1} parent=5 // pred_region
        %s161 = ssub.s32 %s15, 1
        %s162 = sand.u32 %s28, 1
        %s163 = scalar_lea.sflag [#allocation3], %s162
        %s164 = sand.u32 %s28, 1
        %s165 = smul.addr %s164, 576
        %s166 = scalar_lea.vmem [#allocation2], %s165
        // Predicated region
        $region33: #{conv1_relu.1} parent=31 // pred_check
          %p167 = pneg %p41
        $region34: #{conv1_relu.1} parent=31 // pred_check_branch
          %169 = sbr.rel (%p167) target = $region36
        $region35: #{conv1_relu.1} parent=31 // pred_region
          %170 = dma.done %s163, 9216
        $region36: #{conv1_relu.1} parent=31 // pred_fallthru
          _
        %s171 = sand.u32 %s28, 1
        %s172 = scalar_lea.sflag [#allocation3], %s171
        %s173 = sand.u32 %s28, 1
        %s174 = smul.addr %s173, 576
        %s175 = scalar_lea.vmem [#allocation2], %s174
        %p176 = pneg %p41
        %p177 = pneg %p38
        %p178 = pneg %p62
        %p179 = pneg %p59
        %p180 = pneg %p83
        %p181 = pneg %p80
        %p182 = pneg %p109
        %p183 = pneg %p106
        %s184 = sand.u32 %s96, 1
        %s185 = scalar_lea.sflag [#allocation4], %s184
        %s186 = sand.u32 %s96, 1
        %s187 = smul.addr %s186, 144
        %s188 = scalar_lea.vmem [#allocation5], %s187
        %s189 = smul.u32 18, %s20
        %s190 = smul.u32 18, %s20
        %v191 = vld [vmem:[%s1] sm:$0xff]
        %v192 = vld [vmem:[%s166] sm:$0xff]
        %v193 = vld [vmem:[%s166 + $0x8] sm:$0xff]
        %v194 = vld [vmem:[%s166 + $0x10] sm:$0xff]
        %v195 = vld [vmem:[%s166 + $0x18] sm:$0xff]
        %v196 = vld [vmem:[%s166 + $0x20] sm:$0xff]
        %v197 = vld [vmem:[%s166 + $0x28] sm:$0xff]
        %v198 = vld [vmem:[%s166 + $0x30] sm:$0xff]
        %v199 = vld [vmem:[%s166 + $0x38] sm:$0xff]
        %v200 = vld [vmem:[%s166 + $0x40] sm:$0xff]
        %v201 = vld [vmem:[%s166 + $0x48] sm:$0xff]
        %v202 = vld [vmem:[%s166 + $0x50] sm:$0xff]
        %v203 = vld [vmem:[%s166 + $0x58] sm:$0xff]
        %v204 = vld [vmem:[%s166 + $0x60] sm:$0xff]
        %v205 = vld [vmem:[%s166 + $0x68] sm:$0xff]
        %v206 = vld [vmem:[%s166 + $0x70] sm:$0xff]
        %v207 = vld [vmem:[%s166 + $0x78] sm:$0xff]
        %v208 = vld [vmem:[%s166 + $0x80] sm:$0xff]
        %v209 = vld [vmem:[%s166 + $0x88] sm:$0xff]
        %v210 = vld [vmem:[%s166 + $0x90] sm:$0xff]
        %v211 = vld [vmem:[%s166 + $0x98] sm:$0xff]
        %v212 = vld [vmem:[%s166 + $0xa0] sm:$0xff]
        %v213 = vld [vmem:[%s166 + $0xa8] sm:$0xff]
        %v214 = vld [vmem:[%s166 + $0xb0] sm:$0xff]
        %v215 = vld [vmem:[%s166 + $0xb8] sm:$0xff]
        %v216 = vld [vmem:[%s166 + $0xc0] sm:$0xff]
        %v217 = vld [vmem:[%s166 + $0xc8] sm:$0xff]
        %v218 = vld [vmem:[%s166 + $0xd0] sm:$0xff]
        %v219 = vld [vmem:[%s166 + $0xd8] sm:$0xff]
        %v220 = vld [vmem:[%s166 + $0xe0] sm:$0xff]
        %v221 = vld [vmem:[%s166 + $0xe8] sm:$0xff]
        %v222 = vld [vmem:[%s166 + $0xf0] sm:$0xff]
        %v223 = vld [vmem:[%s166 + $0xf8] sm:$0xff]
        %v224 = vld [vmem:[%s166 + $0x100] sm:$0xff]
        %v225 = vld [vmem:[%s166 + $0x108] sm:$0xff]
        %v226 = vld [vmem:[%s166 + $0x110] sm:$0xff]
        %v227 = vld [vmem:[%s166 + $0x118] sm:$0xff]
        %v228 = vld [vmem:[%s166 + $0x120] sm:$0xff]
        %v229 = vld [vmem:[%s166 + $0x128] sm:$0xff]
        %v230 = vld [vmem:[%s166 + $0x130] sm:$0xff]
        %v231 = vld [vmem:[%s166 + $0x138] sm:$0xff]
        %v232 = vld [vmem:[%s166 + $0x140] sm:$0xff]
        %v233 = vld [vmem:[%s166 + $0x148] sm:$0xff]
        %v234 = vld [vmem:[%s166 + $0x150] sm:$0xff]
        %v235 = vld [vmem:[%s166 + $0x158] sm:$0xff]
        %v236 = vld [vmem:[%s166 + $0x160] sm:$0xff]
        %v237 = vld [vmem:[%s166 + $0x168] sm:$0xff]
        %v238 = vld [vmem:[%s166 + $0x170] sm:$0xff]
        %v239 = vld [vmem:[%s166 + $0x178] sm:$0xff]
        %v240 = vld [vmem:[%s166 + $0x180] sm:$0xff]
        %v241 = vld [vmem:[%s166 + $0x188] sm:$0xff]
        %v242 = vld [vmem:[%s166 + $0x190] sm:$0xff]
        %v243 = vld [vmem:[%s166 + $0x198] sm:$0xff]
        %v244 = vld [vmem:[%s166 + $0x1a0] sm:$0xff]
        %v245 = vld [vmem:[%s166 + $0x1a8] sm:$0xff]
        %v246 = vld [vmem:[%s166 + $0x1b0] sm:$0x1]
        %v247 = vld [vmem:[%s166 + $0x1b8] sm:$0x1]
        %v248 = vld [vmem:[%s166 + $0x1c0] sm:$0x1]
        %v249 = vld [vmem:[%s166 + $0x1c8] sm:$0x1]
        %v250 = vld [vmem:[%s166 + $0x1d0] sm:$0x1]
        %v251 = vld [vmem:[%s166 + $0x1d8] sm:$0x1]
        %v252 = vld [vmem:[%s166 + $0x1e0] sm:$0x1]
        %v253 = vld [vmem:[%s166 + $0x1e8] sm:$0x1]
        %v254 = vld [vmem:[%s166 + $0x1f0] sm:$0x1]
        %v255 = vld [vmem:[%s166 + $0x1f8] sm:$0x1]
        %v256 = vld [vmem:[%s166 + $0x200] sm:$0x1]
        %v257 = vld [vmem:[%s166 + $0x208] sm:$0x1]
        %v258 = vld [vmem:[%s166 + $0x210] sm:$0x1]
        %v259 = vld [vmem:[%s166 + $0x218] sm:$0x1]
        %v260 = vld [vmem:[%s166 + $0x220] sm:$0x1]
        %v261 = vld [vmem:[%s166 + $0x228] sm:$0x1]
        %v262 = vld [vmem:[%s166 + $0x230] sm:$0x1]
        %v263 = vld [vmem:[%s166 + $0x238] sm:$0x1]
        %v264 = vld [vmem:[%s2] sm:$0xff]
        %266 = vset.pattern.permute.xlu0 0
        %267 = vperm.xlu0 %266, %v264
        %v268 = vpop.permute.xlu0 %267
        %vm270 = vcmask 203776
        %v272 = vsel %vm270, %v191, 0
        %vm274 = vcmask 1040384
        %v276 = vsel %vm274, %v246, 0
        %v279 = vsel %vm274, %v247, 0
        %v282 = vsel %vm274, %v248, 0
        %v285 = vsel %vm274, %v249, 0
        %v288 = vsel %vm274, %v250, 0
        %v291 = vsel %vm274, %v251, 0
        %v294 = vsel %vm274, %v252, 0
        %v297 = vsel %vm274, %v253, 0
        %v300 = vsel %vm274, %v254, 0
        %v303 = vsel %vm274, %v255, 0
        %v306 = vsel %vm274, %v256, 0
        %v309 = vsel %vm274, %v257, 0
        %v312 = vsel %vm274, %v258, 0
        %v315 = vsel %vm274, %v259, 0
        %v318 = vsel %vm274, %v260, 0
        %v321 = vsel %vm274, %v261, 0
        %v324 = vsel %vm274, %v262, 0
        %v327 = vsel %vm274, %v263, 0
        %329 = vmatprep.subr.mxu0 0.0
        %330 = vmatpush1.msra.mxu0 0.0
        %331 = vmatprep.subr.mxu0 0.0
        %332 = vmatpush1.msra.mxu0 0.0
        %333 = vmatprep.subr.mxu0 0.0
        %334 = vmatpush1.msra.mxu0 0.0
        %335 = vmatprep.subr.mxu0 0.0
        %336 = vmatpush1.msra.mxu0 0.0
        %337 = vmatprep.subr.mxu0 0.0
        %338 = vmatpush1.msra.mxu0 0.0
        %339 = vmatprep.subr.mxu0 0.0
        %340 = vmatpush1.msra.mxu0 0.0
        %341 = vmatprep.subr.mxu0 0.0
        %342 = vmatpush1.msra.mxu0 0.0
        %343 = vmatprep.subr.mxu0 0.0
        %344 = vmatpush1.msra.mxu0 0.0
        %345 = vmatprep.subr.mxu0 0.0
        %346 = vmatpush1.msra.mxu0 0.0
        %347 = vmatprep.subr.mxu0 0.0
        %348 = vmatpush1.msra.mxu0 0.0
        %349 = vmatprep.subr.mxu0 0.0
        %350 = vmatpush1.msra.mxu0 0.0
        %351 = vmatprep.subr.mxu0 0.0
        %352 = vmatpush1.msra.mxu0 0.0
        %353 = vmatprep.subr.mxu0 %v279
        %354 = vmatpush1.msra.mxu0 %v276
        %355 = vmatprep.subr.mxu0 %v229
        %356 = vmatpush1.msra.mxu0 %v228
        %357 = vmatprep.subr.mxu0 %v211
        %358 = vmatpush1.msra.mxu0 %v210
        %359 = vmatprep.subr.mxu0 %v193
        %360 = vmatpush1.msra.mxu0 %v192
        %361 = vmatprep.subr.mxu0 0.0
        %362 = vmatpush2.msra.mxu0 0.0
        %363 = vmatprep.subr.mxu0 0.0
        %364 = vmatpush2.msra.mxu0 0.0
        %365 = vmatprep.subr.mxu0 0.0
        %366 = vmatpush2.msra.mxu0 0.0
        %367 = vmatprep.subr.mxu0 0.0
        %368 = vmatpush2.msra.mxu0 0.0
        %369 = vmatprep.subr.mxu0 0.0
        %370 = vmatpush2.msra.mxu0 0.0
        %371 = vmatprep.subr.mxu0 0.0
        %372 = vmatpush2.msra.mxu0 0.0
        %373 = vmatprep.subr.mxu0 0.0
        %374 = vmatpush2.msra.mxu0 0.0
        %375 = vmatprep.subr.mxu0 0.0
        %376 = vmatpush2.msra.mxu0 0.0
        %377 = vmatprep.subr.mxu0 0.0
        %378 = vmatpush2.msra.mxu0 0.0
        %379 = vmatprep.subr.mxu0 0.0
        %380 = vmatpush2.msra.mxu0 0.0
        %381 = vmatprep.subr.mxu0 0.0
        %382 = vmatpush2.msra.mxu0 0.0
        %383 = vmatprep.subr.mxu0 0.0
        %384 = vmatpush2.msra.mxu0 0.0
        %385 = vmatprep.subr.mxu0 0.0
        %386 = vmatpush2.msra.mxu0 0.0
        %387 = vmatprep.subr.mxu0 0.0
        %388 = vmatpush2.msra.mxu0 0.0
        %389 = vmatprep.subr.mxu0 0.0
        %390 = vmatpush2.msra.mxu0 0.0
        %391 = vmatprep.subr.mxu0 0.0
        %392 = vmatpush2.msra.mxu0 0.0
        %393 = vmatprep.mubr.f32.mxu0 0.0
        %394 = vmatmul.mubr.f32.gmra.mxu0 %v272
        %v395 = vpop.f32.mrf.mxu0
        %v396 = vadd.f32 %v268, %v395
        %v397 = vpop.f32.mrf.mxu0
        %v398 = vadd.f32 %v268, %v397
        %399 = vdwg.mxu0
        %400 = vmatprep.subr.mxu0 0.0
        %401 = vmatpush1.msra.mxu0 0.0
        %402 = vmatprep.subr.mxu0 0.0
        %403 = vmatpush1.msra.mxu0 0.0
        %404 = vmatprep.subr.mxu0 0.0
        %405 = vmatpush1.msra.mxu0 0.0
        %406 = vmatprep.subr.mxu0 0.0
        %407 = vmatpush1.msra.mxu0 0.0
        %408 = vmatprep.subr.mxu0 0.0
        %409 = vmatpush1.msra.mxu0 0.0
        %410 = vmatprep.subr.mxu0 0.0
        %411 = vmatpush1.msra.mxu0 0.0
        %412 = vmatprep.subr.mxu0 0.0
        %413 = vmatpush1.msra.mxu0 0.0
        %414 = vmatprep.subr.mxu0 0.0
        %415 = vmatpush1.msra.mxu0 0.0
        %416 = vmatprep.subr.mxu0 0.0
        %417 = vmatpush1.msra.mxu0 0.0
        %418 = vmatprep.subr.mxu0 0.0
        %419 = vmatpush1.msra.mxu0 0.0
        %420 = vmatprep.subr.mxu0 0.0
        %421 = vmatpush1.msra.mxu0 0.0
        %422 = vmatprep.subr.mxu0 0.0
        %423 = vmatpush1.msra.mxu0 0.0
        %424 = vmatprep.subr.mxu0 %v285
        %425 = vmatpush1.msra.mxu0 %v282
        %426 = vmatprep.subr.mxu0 %v231
        %427 = vmatpush1.msra.mxu0 %v230
        %428 = vmatprep.subr.mxu0 %v213
        %429 = vmatpush1.msra.mxu0 %v212
        %430 = vmatprep.subr.mxu0 %v195
        %431 = vmatpush1.msra.mxu0 %v194
        %432 = vmatprep.subr.mxu0 0.0
        %433 = vmatpush2.msra.mxu0 0.0
        %434 = vmatprep.subr.mxu0 0.0
        %435 = vmatpush2.msra.mxu0 0.0
        %436 = vmatprep.subr.mxu0 0.0
        %437 = vmatpush2.msra.mxu0 0.0
        %438 = vmatprep.subr.mxu0 0.0
        %439 = vmatpush2.msra.mxu0 0.0
        %440 = vmatprep.subr.mxu0 0.0
        %441 = vmatpush2.msra.mxu0 0.0
        %442 = vmatprep.subr.mxu0 0.0
        %443 = vmatpush2.msra.mxu0 0.0
        %444 = vmatprep.subr.mxu0 0.0
        %445 = vmatpush2.msra.mxu0 0.0
        %446 = vmatprep.subr.mxu0 0.0
        %447 = vmatpush2.msra.mxu0 0.0
        %448 = vmatprep.subr.mxu0 0.0
        %449 = vmatpush2.msra.mxu0 0.0
        %450 = vmatprep.subr.mxu0 0.0
        %451 = vmatpush2.msra.mxu0 0.0
        %452 = vmatprep.subr.mxu0 0.0
        %453 = vmatpush2.msra.mxu0 0.0
        %454 = vmatprep.subr.mxu0 0.0
        %455 = vmatpush2.msra.mxu0 0.0
        %456 = vmatprep.subr.mxu0 0.0
        %457 = vmatpush2.msra.mxu0 0.0
        %458 = vmatprep.subr.mxu0 0.0
        %459 = vmatpush2.msra.mxu0 0.0
        %460 = vmatprep.subr.mxu0 0.0
        %461 = vmatpush2.msra.mxu0 0.0
        %462 = vmatprep.subr.mxu0 0.0
        %463 = vmatpush2.msra.mxu0 0.0
        %464 = vmatprep.mubr.f32.mxu0 0.0
        %465 = vmatmul.mubr.f32.gmra.mxu0 %v272
        %v466 = vpop.f32.mrf.mxu0
        %v467 = vadd.f32 %v268, %v466
        %v468 = vpop.f32.mrf.mxu0
        %v469 = vadd.f32 %v268, %v468
        %470 = vdwg.mxu0
        %471 = vmatprep.subr.mxu0 0.0
        %472 = vmatpush1.msra.mxu0 0.0
        %473 = vmatprep.subr.mxu0 0.0
        %474 = vmatpush1.msra.mxu0 0.0
        %475 = vmatprep.subr.mxu0 0.0
        %476 = vmatpush1.msra.mxu0 0.0
        %477 = vmatprep.subr.mxu0 0.0
        %478 = vmatpush1.msra.mxu0 0.0
        %479 = vmatprep.subr.mxu0 0.0
        %480 = vmatpush1.msra.mxu0 0.0
        %481 = vmatprep.subr.mxu0 0.0
        %482 = vmatpush1.msra.mxu0 0.0
        %483 = vmatprep.subr.mxu0 0.0
        %484 = vmatpush1.msra.mxu0 0.0
        %485 = vmatprep.subr.mxu0 0.0
        %486 = vmatpush1.msra.mxu0 0.0
        %487 = vmatprep.subr.mxu0 0.0
        %488 = vmatpush1.msra.mxu0 0.0
        %489 = vmatprep.subr.mxu0 0.0
        %490 = vmatpush1.msra.mxu0 0.0
        %491 = vmatprep.subr.mxu0 0.0
        %492 = vmatpush1.msra.mxu0 0.0
        %493 = vmatprep.subr.mxu0 0.0
        %494 = vmatpush1.msra.mxu0 0.0
        %495 = vmatprep.subr.mxu0 %v291
        %496 = vmatpush1.msra.mxu0 %v288
        %497 = vmatprep.subr.mxu0 %v233
        %498 = vmatpush1.msra.mxu0 %v232
        %499 = vmatprep.subr.mxu0 %v215
        %500 = vmatpush1.msra.mxu0 %v214
        %501 = vmatprep.subr.mxu0 %v197
        %502 = vmatpush1.msra.mxu0 %v196
        %503 = vmatprep.subr.mxu0 0.0
        %504 = vmatpush2.msra.mxu0 0.0
        %505 = vmatprep.subr.mxu0 0.0
        %506 = vmatpush2.msra.mxu0 0.0
        %507 = vmatprep.subr.mxu0 0.0
        %508 = vmatpush2.msra.mxu0 0.0
        %509 = vmatprep.subr.mxu0 0.0
        %510 = vmatpush2.msra.mxu0 0.0
        %511 = vmatprep.subr.mxu0 0.0
        %512 = vmatpush2.msra.mxu0 0.0
        %513 = vmatprep.subr.mxu0 0.0
        %514 = vmatpush2.msra.mxu0 0.0
        %515 = vmatprep.subr.mxu0 0.0
        %516 = vmatpush2.msra.mxu0 0.0
        %517 = vmatprep.subr.mxu0 0.0
        %518 = vmatpush2.msra.mxu0 0.0
        %519 = vmatprep.subr.mxu0 0.0
        %520 = vmatpush2.msra.mxu0 0.0
        %521 = vmatprep.subr.mxu0 0.0
        %522 = vmatpush2.msra.mxu0 0.0
        %523 = vmatprep.subr.mxu0 0.0
        %524 = vmatpush2.msra.mxu0 0.0
        %525 = vmatprep.subr.mxu0 0.0
        %526 = vmatpush2.msra.mxu0 0.0
        %527 = vmatprep.subr.mxu0 0.0
        %528 = vmatpush2.msra.mxu0 0.0
        %529 = vmatprep.subr.mxu0 0.0
        %530 = vmatpush2.msra.mxu0 0.0
        %531 = vmatprep.subr.mxu0 0.0
        %532 = vmatpush2.msra.mxu0 0.0
        %533 = vmatprep.subr.mxu0 0.0
        %534 = vmatpush2.msra.mxu0 0.0
        %535 = vmatprep.mubr.f32.mxu0 0.0
        %536 = vmatmul.mubr.f32.gmra.mxu0 %v272
        %v537 = vpop.f32.mrf.mxu0
        %v538 = vadd.f32 %v268, %v537
        %v539 = vpop.f32.mrf.mxu0
        %v540 = vadd.f32 %v268, %v539
        %541 = vdwg.mxu0
        %542 = vmatprep.subr.mxu0 0.0
        %543 = vmatpush1.msra.mxu0 0.0
        %544 = vmatprep.subr.mxu0 0.0
        %545 = vmatpush1.msra.mxu0 0.0
        %546 = vmatprep.subr.mxu0 0.0
        %547 = vmatpush1.msra.mxu0 0.0
        %548 = vmatprep.subr.mxu0 0.0
        %549 = vmatpush1.msra.mxu0 0.0
        %550 = vmatprep.subr.mxu0 0.0
        %551 = vmatpush1.msra.mxu0 0.0
        %552 = vmatprep.subr.mxu0 0.0
        %553 = vmatpush1.msra.mxu0 0.0
        %554 = vmatprep.subr.mxu0 0.0
        %555 = vmatpush1.msra.mxu0 0.0
        %556 = vmatprep.subr.mxu0 0.0
        %557 = vmatpush1.msra.mxu0 0.0
        %558 = vmatprep.subr.mxu0 0.0
        %559 = vmatpush1.msra.mxu0 0.0
        %560 = vmatprep.subr.mxu0 0.0
        %561 = vmatpush1.msra.mxu0 0.0
        %562 = vmatprep.subr.mxu0 0.0
        %563 = vmatpush1.msra.mxu0 0.0
        %564 = vmatprep.subr.mxu0 0.0
        %565 = vmatpush1.msra.mxu0 0.0
        %566 = vmatprep.subr.mxu0 %v297
        %567 = vmatpush1.msra.mxu0 %v294
        %568 = vmatprep.subr.mxu0 %v235
        %569 = vmatpush1.msra.mxu0 %v234
        %570 = vmatprep.subr.mxu0 %v217
        %571 = vmatpush1.msra.mxu0 %v216
        %572 = vmatprep.subr.mxu0 %v199
        %573 = vmatpush1.msra.mxu0 %v198
        %574 = vmatprep.subr.mxu0 0.0
        %575 = vmatpush2.msra.mxu0 0.0
        %576 = vmatprep.subr.mxu0 0.0
        %577 = vmatpush2.msra.mxu0 0.0
        %578 = vmatprep.subr.mxu0 0.0
        %579 = vmatpush2.msra.mxu0 0.0
        %580 = vmatprep.subr.mxu0 0.0
        %581 = vmatpush2.msra.mxu0 0.0
        %582 = vmatprep.subr.mxu0 0.0
        %583 = vmatpush2.msra.mxu0 0.0
        %584 = vmatprep.subr.mxu0 0.0
        %585 = vmatpush2.msra.mxu0 0.0
        %586 = vmatprep.subr.mxu0 0.0
        %587 = vmatpush2.msra.mxu0 0.0
        %588 = vmatprep.subr.mxu0 0.0
        %589 = vmatpush2.msra.mxu0 0.0
        %590 = vmatprep.subr.mxu0 0.0
        %591 = vmatpush2.msra.mxu0 0.0
        %592 = vmatprep.subr.mxu0 0.0
        %593 = vmatpush2.msra.mxu0 0.0
        %594 = vmatprep.subr.mxu0 0.0
        %595 = vmatpush2.msra.mxu0 0.0
        %596 = vmatprep.subr.mxu0 0.0
        %597 = vmatpush2.msra.mxu0 0.0
        %598 = vmatprep.subr.mxu0 0.0
        %599 = vmatpush2.msra.mxu0 0.0
        %600 = vmatprep.subr.mxu0 0.0
        %601 = vmatpush2.msra.mxu0 0.0
        %602 = vmatprep.subr.mxu0 0.0
        %603 = vmatpush2.msra.mxu0 0.0
        %604 = vmatprep.subr.mxu0 0.0
        %605 = vmatpush2.msra.mxu0 0.0
        %606 = vmatprep.mubr.f32.mxu0 0.0
        %607 = vmatmul.mubr.f32.gmra.mxu0 %v272
        %v608 = vpop.f32.mrf.mxu0
        %v609 = vadd.f32 %v268, %v608
        %v610 = vpop.f32.mrf.mxu0
        %v611 = vadd.f32 %v268, %v610
        %612 = vdwg.mxu0
        %613 = vmatprep.subr.mxu0 0.0
        %614 = vmatpush1.msra.mxu0 0.0
        %615 = vmatprep.subr.mxu0 0.0
        %616 = vmatpush1.msra.mxu0 0.0
        %617 = vmatprep.subr.mxu0 0.0
        %618 = vmatpush1.msra.mxu0 0.0
        %619 = vmatprep.subr.mxu0 0.0
        %620 = vmatpush1.msra.mxu0 0.0
        %621 = vmatprep.subr.mxu0 0.0
        %622 = vmatpush1.msra.mxu0 0.0
        %623 = vmatprep.subr.mxu0 0.0
        %624 = vmatpush1.msra.mxu0 0.0
        %625 = vmatprep.subr.mxu0 0.0
        %626 = vmatpush1.msra.mxu0 0.0
        %627 = vmatprep.subr.mxu0 0.0
        %628 = vmatpush1.msra.mxu0 0.0
        %629 = vmatprep.subr.mxu0 0.0
        %630 = vmatpush1.msra.mxu0 0.0
        %631 = vmatprep.subr.mxu0 0.0
        %632 = vmatpush1.msra.mxu0 0.0
        %633 = vmatprep.subr.mxu0 0.0
        %634 = vmatpush1.msra.mxu0 0.0
        %635 = vmatprep.subr.mxu0 0.0
        %636 = vmatpush1.msra.mxu0 0.0
        %637 = vmatprep.subr.mxu0 %v303
        %638 = vmatpush1.msra.mxu0 %v300
        %639 = vmatprep.subr.mxu0 %v237
        %640 = vmatpush1.msra.mxu0 %v236
        %641 = vmatprep.subr.mxu0 %v219
        %642 = vmatpush1.msra.mxu0 %v218
        %643 = vmatprep.subr.mxu0 %v201
        %644 = vmatpush1.msra.mxu0 %v200
        %645 = vmatprep.subr.mxu0 0.0
        %646 = vmatpush2.msra.mxu0 0.0
        %647 = vmatprep.subr.mxu0 0.0
        %648 = vmatpush2.msra.mxu0 0.0
        %649 = vmatprep.subr.mxu0 0.0
        %650 = vmatpush2.msra.mxu0 0.0
        %651 = vmatprep.subr.mxu0 0.0
        %652 = vmatpush2.msra.mxu0 0.0
        %653 = vmatprep.subr.mxu0 0.0
        %654 = vmatpush2.msra.mxu0 0.0
        %655 = vmatprep.subr.mxu0 0.0
        %656 = vmatpush2.msra.mxu0 0.0
        %657 = vmatprep.subr.mxu0 0.0
        %658 = vmatpush2.msra.mxu0 0.0
        %659 = vmatprep.subr.mxu0 0.0
        %660 = vmatpush2.msra.mxu0 0.0
        %661 = vmatprep.subr.mxu0 0.0
        %662 = vmatpush2.msra.mxu0 0.0
        %663 = vmatprep.subr.mxu0 0.0
        %664 = vmatpush2.msra.mxu0 0.0
        %665 = vmatprep.subr.mxu0 0.0
        %666 = vmatpush2.msra.mxu0 0.0
        %667 = vmatprep.subr.mxu0 0.0
        %668 = vmatpush2.msra.mxu0 0.0
        %669 = vmatprep.subr.mxu0 0.0
        %670 = vmatpush2.msra.mxu0 0.0
        %671 = vmatprep.subr.mxu0 0.0
        %672 = vmatpush2.msra.mxu0 0.0
        %673 = vmatprep.subr.mxu0 0.0
        %674 = vmatpush2.msra.mxu0 0.0
        %675 = vmatprep.subr.mxu0 0.0
        %676 = vmatpush2.msra.mxu0 0.0
        %677 = vmatprep.mubr.f32.mxu0 0.0
        %678 = vmatmul.mubr.f32.gmra.mxu0 %v272
        %v679 = vpop.f32.mrf.mxu0
        %v680 = vadd.f32 %v268, %v679
        %v681 = vpop.f32.mrf.mxu0
        %v682 = vadd.f32 %v268, %v681
        %683 = vdwg.mxu0
        %684 = vmatprep.subr.mxu0 0.0
        %685 = vmatpush1.msra.mxu0 0.0
        %686 = vmatprep.subr.mxu0 0.0
        %687 = vmatpush1.msra.mxu0 0.0
        %688 = vmatprep.subr.mxu0 0.0
        %689 = vmatpush1.msra.mxu0 0.0
        %690 = vmatprep.subr.mxu0 0.0
        %691 = vmatpush1.msra.mxu0 0.0
        %692 = vmatprep.subr.mxu0 0.0
        %693 = vmatpush1.msra.mxu0 0.0
        %694 = vmatprep.subr.mxu0 0.0
        %695 = vmatpush1.msra.mxu0 0.0
        %696 = vmatprep.subr.mxu0 0.0
        %697 = vmatpush1.msra.mxu0 0.0
        %698 = vmatprep.subr.mxu0 0.0
        %699 = vmatpush1.msra.mxu0 0.0
        %700 = vmatprep.subr.mxu0 0.0
        %701 = vmatpush1.msra.mxu0 0.0
        %702 = vmatprep.subr.mxu0 0.0
        %703 = vmatpush1.msra.mxu0 0.0
        %704 = vmatprep.subr.mxu0 0.0
        %705 = vmatpush1.msra.mxu0 0.0
        %706 = vmatprep.subr.mxu0 0.0
        %707 = vmatpush1.msra.mxu0 0.0
        %708 = vmatprep.subr.mxu0 %v309
        %709 = vmatpush1.msra.mxu0 %v306
        %710 = vmatprep.subr.mxu0 %v239
        %711 = vmatpush1.msra.mxu0 %v238
        %712 = vmatprep.subr.mxu0 %v221
        %713 = vmatpush1.msra.mxu0 %v220
        %714 = vmatprep.subr.mxu0 %v203
        %715 = vmatpush1.msra.mxu0 %v202
        %716 = vmatprep.subr.mxu0 0.0
        %717 = vmatpush2.msra.mxu0 0.0
        %718 = vmatprep.subr.mxu0 0.0
        %719 = vmatpush2.msra.mxu0 0.0
        %720 = vmatprep.subr.mxu0 0.0
        %721 = vmatpush2.msra.mxu0 0.0
        %722 = vmatprep.subr.mxu0 0.0
        %723 = vmatpush2.msra.mxu0 0.0
        %724 = vmatprep.subr.mxu0 0.0
        %725 = vmatpush2.msra.mxu0 0.0
        %726 = vmatprep.subr.mxu0 0.0
        %727 = vmatpush2.msra.mxu0 0.0
        %728 = vmatprep.subr.mxu0 0.0
        %729 = vmatpush2.msra.mxu0 0.0
        %730 = vmatprep.subr.mxu0 0.0
        %731 = vmatpush2.msra.mxu0 0.0
        %732 = vmatprep.subr.mxu0 0.0
        %733 = vmatpush2.msra.mxu0 0.0
        %734 = vmatprep.subr.mxu0 0.0
        %735 = vmatpush2.msra.mxu0 0.0
        %736 = vmatprep.subr.mxu0 0.0
        %737 = vmatpush2.msra.mxu0 0.0
        %738 = vmatprep.subr.mxu0 0.0
        %739 = vmatpush2.msra.mxu0 0.0
        %740 = vmatprep.subr.mxu0 0.0
        %741 = vmatpush2.msra.mxu0 0.0
        %742 = vmatprep.subr.mxu0 0.0
        %743 = vmatpush2.msra.mxu0 0.0
        %744 = vmatprep.subr.mxu0 0.0
        %745 = vmatpush2.msra.mxu0 0.0
        %746 = vmatprep.subr.mxu0 0.0
        %747 = vmatpush2.msra.mxu0 0.0
        %748 = vmatprep.mubr.f32.mxu0 0.0
        %749 = vmatmul.mubr.f32.gmra.mxu0 %v272
        %v750 = vpop.f32.mrf.mxu0
        %v751 = vadd.f32 %v268, %v750
        %v752 = vpop.f32.mrf.mxu0
        %v753 = vadd.f32 %v268, %v752
        %754 = vdwg.mxu0
        %755 = vmatprep.subr.mxu0 0.0
        %756 = vmatpush1.msra.mxu0 0.0
        %757 = vmatprep.subr.mxu0 0.0
        %758 = vmatpush1.msra.mxu0 0.0
        %759 = vmatprep.subr.mxu0 0.0
        %760 = vmatpush1.msra.mxu0 0.0
        %761 = vmatprep.subr.mxu0 0.0
        %762 = vmatpush1.msra.mxu0 0.0
        %763 = vmatprep.subr.mxu0 0.0
        %764 = vmatpush1.msra.mxu0 0.0
        %765 = vmatprep.subr.mxu0 0.0
        %766 = vmatpush1.msra.mxu0 0.0
        %767 = vmatprep.subr.mxu0 0.0
        %768 = vmatpush1.msra.mxu0 0.0
        %769 = vmatprep.subr.mxu0 0.0
        %770 = vmatpush1.msra.mxu0 0.0
        %771 = vmatprep.subr.mxu0 0.0
        %772 = vmatpush1.msra.mxu0 0.0
        %773 = vmatprep.subr.mxu0 0.0
        %774 = vmatpush1.msra.mxu0 0.0
        %775 = vmatprep.subr.mxu0 0.0
        %776 = vmatpush1.msra.mxu0 0.0
        %777 = vmatprep.subr.mxu0 0.0
        %778 = vmatpush1.msra.mxu0 0.0
        %779 = vmatprep.subr.mxu0 %v315
        %780 = vmatpush1.msra.mxu0 %v312
        %781 = vmatprep.subr.mxu0 %v241
        %782 = vmatpush1.msra.mxu0 %v240
        %783 = vmatprep.subr.mxu0 %v223
        %784 = vmatpush1.msra.mxu0 %v222
        %785 = vmatprep.subr.mxu0 %v205
        %786 = vmatpush1.msra.mxu0 %v204
        %787 = vmatprep.subr.mxu0 0.0
        %788 = vmatpush2.msra.mxu0 0.0
        %789 = vmatprep.subr.mxu0 0.0
        %790 = vmatpush2.msra.mxu0 0.0
        %791 = vmatprep.subr.mxu0 0.0
        %792 = vmatpush2.msra.mxu0 0.0
        %793 = vmatprep.subr.mxu0 0.0
        %794 = vmatpush2.msra.mxu0 0.0
        %795 = vmatprep.subr.mxu0 0.0
        %796 = vmatpush2.msra.mxu0 0.0
        %797 = vmatprep.subr.mxu0 0.0
        %798 = vmatpush2.msra.mxu0 0.0
        %799 = vmatprep.subr.mxu0 0.0
        %800 = vmatpush2.msra.mxu0 0.0
        %801 = vmatprep.subr.mxu0 0.0
        %802 = vmatpush2.msra.mxu0 0.0
        %803 = vmatprep.subr.mxu0 0.0
        %804 = vmatpush2.msra.mxu0 0.0
        %805 = vmatprep.subr.mxu0 0.0
        %806 = vmatpush2.msra.mxu0 0.0
        %807 = vmatprep.subr.mxu0 0.0
        %808 = vmatpush2.msra.mxu0 0.0
        %809 = vmatprep.subr.mxu0 0.0
        %810 = vmatpush2.msra.mxu0 0.0
        %811 = vmatprep.subr.mxu0 0.0
        %812 = vmatpush2.msra.mxu0 0.0
        %813 = vmatprep.subr.mxu0 0.0
        %814 = vmatpush2.msra.mxu0 0.0
        %815 = vmatprep.subr.mxu0 0.0
        %816 = vmatpush2.msra.mxu0 0.0
        %817 = vmatprep.subr.mxu0 0.0
        %818 = vmatpush2.msra.mxu0 0.0
        %819 = vmatprep.mubr.f32.mxu0 0.0
        %820 = vmatmul.mubr.f32.gmra.mxu0 %v272
        %v821 = vpop.f32.mrf.mxu0
        %v822 = vadd.f32 %v268, %v821
        %v823 = vpop.f32.mrf.mxu0
        %v824 = vadd.f32 %v268, %v823
        %825 = vdwg.mxu0
        %826 = vmatprep.subr.mxu0 0.0
        %827 = vmatpush1.msra.mxu0 0.0
        %828 = vmatprep.subr.mxu0 0.0
        %829 = vmatpush1.msra.mxu0 0.0
        %830 = vmatprep.subr.mxu0 0.0
        %831 = vmatpush1.msra.mxu0 0.0
        %832 = vmatprep.subr.mxu0 0.0
        %833 = vmatpush1.msra.mxu0 0.0
        %834 = vmatprep.subr.mxu0 0.0
        %835 = vmatpush1.msra.mxu0 0.0
        %836 = vmatprep.subr.mxu0 0.0
        %837 = vmatpush1.msra.mxu0 0.0
        %838 = vmatprep.subr.mxu0 0.0
        %839 = vmatpush1.msra.mxu0 0.0
        %840 = vmatprep.subr.mxu0 0.0
        %841 = vmatpush1.msra.mxu0 0.0
        %842 = vmatprep.subr.mxu0 0.0
        %843 = vmatpush1.msra.mxu0 0.0
        %844 = vmatprep.subr.mxu0 0.0
        %845 = vmatpush1.msra.mxu0 0.0
        %846 = vmatprep.subr.mxu0 0.0
        %847 = vmatpush1.msra.mxu0 0.0
        %848 = vmatprep.subr.mxu0 0.0
        %849 = vmatpush1.msra.mxu0 0.0
        %850 = vmatprep.subr.mxu0 %v321
        %851 = vmatpush1.msra.mxu0 %v318
        %852 = vmatprep.subr.mxu0 %v243
        %853 = vmatpush1.msra.mxu0 %v242
        %854 = vmatprep.subr.mxu0 %v225
        %855 = vmatpush1.msra.mxu0 %v224
        %856 = vmatprep.subr.mxu0 %v207
        %857 = vmatpush1.msra.mxu0 %v206
        %858 = vmatprep.subr.mxu0 0.0
        %859 = vmatpush2.msra.mxu0 0.0
        %860 = vmatprep.subr.mxu0 0.0
        %861 = vmatpush2.msra.mxu0 0.0
        %862 = vmatprep.subr.mxu0 0.0
        %863 = vmatpush2.msra.mxu0 0.0
        %864 = vmatprep.subr.mxu0 0.0
        %865 = vmatpush2.msra.mxu0 0.0
        %866 = vmatprep.subr.mxu0 0.0
        %867 = vmatpush2.msra.mxu0 0.0
        %868 = vmatprep.subr.mxu0 0.0
        %869 = vmatpush2.msra.mxu0 0.0
        %870 = vmatprep.subr.mxu0 0.0
        %871 = vmatpush2.msra.mxu0 0.0
        %872 = vmatprep.subr.mxu0 0.0
        %873 = vmatpush2.msra.mxu0 0.0
        %874 = vmatprep.subr.mxu0 0.0
        %875 = vmatpush2.msra.mxu0 0.0
        %876 = vmatprep.subr.mxu0 0.0
        %877 = vmatpush2.msra.mxu0 0.0
        %878 = vmatprep.subr.mxu0 0.0
        %879 = vmatpush2.msra.mxu0 0.0
        %880 = vmatprep.subr.mxu0 0.0
        %881 = vmatpush2.msra.mxu0 0.0
        %882 = vmatprep.subr.mxu0 0.0
        %883 = vmatpush2.msra.mxu0 0.0
        %884 = vmatprep.subr.mxu0 0.0
        %885 = vmatpush2.msra.mxu0 0.0
        %886 = vmatprep.subr.mxu0 0.0
        %887 = vmatpush2.msra.mxu0 0.0
        %888 = vmatprep.subr.mxu0 0.0
        %889 = vmatpush2.msra.mxu0 0.0
        %890 = vmatprep.mubr.f32.mxu0 0.0
        %891 = vmatmul.mubr.f32.gmra.mxu0 %v272
        %v892 = vpop.f32.mrf.mxu0
        %v893 = vadd.f32 %v268, %v892
        %v894 = vpop.f32.mrf.mxu0
        %v895 = vadd.f32 %v268, %v894
        %896 = vdwg.mxu0
        %897 = vmatprep.subr.mxu0 0.0
        %898 = vmatpush1.msra.mxu0 0.0
        %899 = vmatprep.subr.mxu0 0.0
        %900 = vmatpush1.msra.mxu0 0.0
        %901 = vmatprep.subr.mxu0 0.0
        %902 = vmatpush1.msra.mxu0 0.0
        %903 = vmatprep.subr.mxu0 0.0
        %904 = vmatpush1.msra.mxu0 0.0
        %905 = vmatprep.subr.mxu0 0.0
        %906 = vmatpush1.msra.mxu0 0.0
        %907 = vmatprep.subr.mxu0 0.0
        %908 = vmatpush1.msra.mxu0 0.0
        %909 = vmatprep.subr.mxu0 0.0
        %910 = vmatpush1.msra.mxu0 0.0
        %911 = vmatprep.subr.mxu0 0.0
        %912 = vmatpush1.msra.mxu0 0.0
        %913 = vmatprep.subr.mxu0 0.0
        %914 = vmatpush1.msra.mxu0 0.0
        %915 = vmatprep.subr.mxu0 0.0
        %916 = vmatpush1.msra.mxu0 0.0
        %917 = vmatprep.subr.mxu0 0.0
        %918 = vmatpush1.msra.mxu0 0.0
        %919 = vmatprep.subr.mxu0 0.0
        %920 = vmatpush1.msra.mxu0 0.0
        %921 = vmatprep.subr.mxu0 %v327
        %922 = vmatpush1.msra.mxu0 %v324
        %923 = vmatprep.subr.mxu0 %v245
        %924 = vmatpush1.msra.mxu0 %v244
        %925 = vmatprep.subr.mxu0 %v227
        %926 = vmatpush1.msra.mxu0 %v226
        %927 = vmatprep.subr.mxu0 %v209
        %928 = vmatpush1.msra.mxu0 %v208
        %929 = vmatprep.subr.mxu0 0.0
        %930 = vmatpush2.msra.mxu0 0.0
        %931 = vmatprep.subr.mxu0 0.0
        %932 = vmatpush2.msra.mxu0 0.0
        %933 = vmatprep.subr.mxu0 0.0
        %934 = vmatpush2.msra.mxu0 0.0
        %935 = vmatprep.subr.mxu0 0.0
        %936 = vmatpush2.msra.mxu0 0.0
        %937 = vmatprep.subr.mxu0 0.0
        %938 = vmatpush2.msra.mxu0 0.0
        %939 = vmatprep.subr.mxu0 0.0
        %940 = vmatpush2.msra.mxu0 0.0
        %941 = vmatprep.subr.mxu0 0.0
        %942 = vmatpush2.msra.mxu0 0.0
        %943 = vmatprep.subr.mxu0 0.0
        %944 = vmatpush2.msra.mxu0 0.0
        %945 = vmatprep.subr.mxu0 0.0
        %946 = vmatpush2.msra.mxu0 0.0
        %947 = vmatprep.subr.mxu0 0.0
        %948 = vmatpush2.msra.mxu0 0.0
        %949 = vmatprep.subr.mxu0 0.0
        %950 = vmatpush2.msra.mxu0 0.0
        %951 = vmatprep.subr.mxu0 0.0
        %952 = vmatpush2.msra.mxu0 0.0
        %953 = vmatprep.subr.mxu0 0.0
        %954 = vmatpush2.msra.mxu0 0.0
        %955 = vmatprep.subr.mxu0 0.0
        %956 = vmatpush2.msra.mxu0 0.0
        %957 = vmatprep.subr.mxu0 0.0
        %958 = vmatpush2.msra.mxu0 0.0
        %959 = vmatprep.subr.mxu0 0.0
        %960 = vmatpush2.msra.mxu0 0.0
        %961 = vmatprep.mubr.f32.mxu0 0.0
        %962 = vmatmul.mubr.f32.gmra.mxu0 %v272
        %v963 = vpop.f32.mrf.mxu0
        %v964 = vadd.f32 %v268, %v963
        %v965 = vpop.f32.mrf.mxu0
        %v966 = vadd.f32 %v268, %v965
        %967 = vdwg.mxu0
        %v968 = vmax.f32 %v396, 0.0
        %v969 = vmax.f32 %v398, 0.0
        %v970 = vmax.f32 %v467, 0.0
        %v971 = vmax.f32 %v469, 0.0
        %v972 = vmax.f32 %v538, 0.0
        %v973 = vmax.f32 %v540, 0.0
        %v974 = vmax.f32 %v609, 0.0
        %v975 = vmax.f32 %v611, 0.0
        %v976 = vmax.f32 %v680, 0.0
        %v977 = vmax.f32 %v682, 0.0
        %v978 = vmax.f32 %v751, 0.0
        %v979 = vmax.f32 %v753, 0.0
        %v980 = vmax.f32 %v822, 0.0
        %v981 = vmax.f32 %v824, 0.0
        %v982 = vmax.f32 %v893, 0.0
        %v983 = vmax.f32 %v895, 0.0
        %v984 = vmax.f32 %v964, 0.0
        %v985 = vmax.f32 %v966, 0.0
        %986 = vst [vmem:[%s188] sm:$0xff] %v968
        %987 = vst [vmem:[%s188 + $0x8] sm:$0xff] %v969
        %988 = vst [vmem:[%s188 + $0x10] sm:$0xff] %v970
        %989 = vst [vmem:[%s188 + $0x18] sm:$0xff] %v971
        %990 = vst [vmem:[%s188 + $0x20] sm:$0xff] %v972
        %991 = vst [vmem:[%s188 + $0x28] sm:$0xff] %v973
        %992 = vst [vmem:[%s188 + $0x30] sm:$0xff] %v974
        %993 = vst [vmem:[%s188 + $0x38] sm:$0xff] %v975
        %994 = vst [vmem:[%s188 + $0x40] sm:$0xff] %v976
        %995 = vst [vmem:[%s188 + $0x48] sm:$0xff] %v977
        %996 = vst [vmem:[%s188 + $0x50] sm:$0xff] %v978
        %997 = vst [vmem:[%s188 + $0x58] sm:$0xff] %v979
        %998 = vst [vmem:[%s188 + $0x60] sm:$0xff] %v980
        %999 = vst [vmem:[%s188 + $0x68] sm:$0xff] %v981
        %1000 = vst [vmem:[%s188 + $0x70] sm:$0xff] %v982
        %1001 = vst [vmem:[%s188 + $0x78] sm:$0xff] %v983
        %1002 = vst [vmem:[%s188 + $0x80] sm:$0xff] %v984
        %1003 = vst [vmem:[%s188 + $0x88] sm:$0xff] %v985
        %s1004 = sand.u32 %s96, 1
        %s1005 = scalar_lea.sflag [#allocation4], %s1004
        %s1006 = sand.u32 %s96, 1
        %s1007 = smul.addr %s1006, 144
        %s1008 = scalar_lea.vmem [#allocation5], %s1007
        // Predicated region
        $region37: #{conv1_relu.1} parent=31 // pred_check
          %p1009 = pneg %p106
        $region38: #{conv1_relu.1} parent=31 // pred_check_branch
          %1011 = sbr.rel (%p1009) target = $region40
        $region39: #{conv1_relu.1} parent=31 // pred_region
          %s1012 = smul.u32 18, %s20
          %s1014 = ssub.s32 2304, 2304
          %1015 = vsyncadd %s1005, %s1014
          %s1016 = smul.addr %s1012, 128
          %s1017 = scalar_lea.hbm %s3, %s1016
          %s1019 = sshll.u32 %s1008, 4
          %s1020 = int_to_ptr.vmem [resolvable:$true] %s1019
          %1022 = dma.vmem_to_hbm [thread:$0]  %s1020, 2304, %s1017, %s1005
        $region40: #{conv1_relu.1} parent=31 // pred_fallthru
          _
      $region32: #{conv1_relu.1} parent=5 // pred_fallthru
        _
      %p1023 = scmp.le.s32.totalorder 2, %s15
      // Predicated region
      $region41: #{conv1_relu.1} parent=5 // pred_check
        %p1024 = pneg %p1023
      $region42: #{conv1_relu.1} parent=5 // pred_check_branch
        %1026 = sbr.rel (%p1024) target = $region44
      $region43: #{conv1_relu.1} parent=5 // pred_region
        %s1027 = ssub.s32 %s15, 2
        // Predicated region
        $region45: #{conv1_relu.1} parent=43 // pred_check
          %p1028 = pneg %p112
        $region46: #{conv1_relu.1} parent=43 // pred_check_branch
          %1030 = sbr.rel (%p1028) target = $region48
        $region47: #{conv1_relu.1} parent=43 // pred_region
          %s1031 = sand.u32 %s97, 1
          %s1032 = scalar_lea.sflag [#allocation4], %s1031
          %s1033 = sand.u32 %s97, 1
          %s1034 = smul.addr %s1033, 144
          %s1035 = scalar_lea.vmem [#allocation5], %s1034
          %1036 = dma.done %s1032, 2304
        $region48: #{conv1_relu.1} parent=43 // pred_fallthru
          _
      $region44: #{conv1_relu.1} parent=5 // pred_fallthru
        _
    $region6: #{conv1_relu.1} parent=1 // loop_footer
      %s19 = sadd.s32 1, %s15
    $region7: #{conv1_relu.1} parent=1 // loop_footer_branch
      %14 = sbr.rel target = $region3
    $region8: #{conv1_relu.1} parent=1 // loop_exit
      _
    %1037 = vsyncpa [#allocation3], 1
    %s1038 = scalar_lea.sflag [#allocation3], 1
    %1039 = vsyncpa %s1038, 1
    %1040 = vsyncpa [#allocation4], 1
    %s1041 = scalar_lea.sflag [#allocation4], 1
    %1042 = vsyncpa %s1041, 1

</llo_original>
